<compile_context>
chip_gen: v7x
topology: tpu7x:2x2x1
jax: 0.10.0
libtpu: 0.0.40
codegen_flags: <defaults>
</compile_context>

<pallas_src>
import functools

import jax
import jax.numpy as jnp
from jax.experimental import pallas as pl
from jax.experimental.pallas import tpu as pltpu


# ----------------------------- kernel ---------------------------------------

def dqn_kernel(xT_ref, w1T_ref, b1_ref, w2T_ref, b2_ref, w3r_ref, b3_ref, o_ref):
    # ---- layer 1: h1 = relu(W1 @ x + b1)   (64,4) @ (4,TB) on the MXU.
    h1 = jnp.dot(w1T_ref[...], xT_ref[...],
                 preferred_element_type=jnp.float32) + b1_ref[...]      # (64, TB)
    h1 = jnp.maximum(h1, 0.0)

    # ---- layer 2: h2 = relu(W2 @ h1 + b2)  (64,64) @ (64,TB) on the MXU.
    h2 = jnp.dot(w2T_ref[...], h1,
                 preferred_element_type=jnp.float32) + b2_ref[...]      # (64, TB)
    h2 = jnp.maximum(h2, 0.0)

    # ---- layer 3: q = w3 . h2 + b3         (1,64) @ (64,TB) on the MXU.
    q = jnp.dot(w3r_ref[...], h2,
                preferred_element_type=jnp.float32) + b3_ref[0, 0]      # (1, TB)
    o_ref[...] = q.astype(o_ref.dtype)


# ----------------------------- tiling helpers --------------------------------

def _default_tile_b_max():
    try:
        kind = jax.devices()[0].device_kind.lower()
    except Exception:
        kind = ""
    # v5e: single vector-store slot + slower MXU -> keep tiles moderate.
    return 2048 if "v5" in kind else 8192


def _pick_tiling(n, tile_b_max):
    """Pad batch only to a multiple of 128 (low waste) and derive the tile.

    Returns (tile_b, n_pad, grid_len) with n_pad = grid_len * tile_b and
    grid_len >= 2 whenever the batch spans at least two 128-lane groups
    (so both v7x TensorCores get work on the "parallel" grid axis).
    """
    n128 = pl.cdiv(n, 128) * 128
    tile_b_max = max(128, (int(tile_b_max) // 128) * 128)
    g = pl.cdiv(n128, tile_b_max)
    if n128 >= 256:
        g = max(g, 2)
    tile_b = pl.cdiv(n128 // 128, g) * 128
    n_pad = g * tile_b
    return tile_b, n_pad, g


# ----------------------------- wrapper ---------------------------------------

def deep_q_network_forward(x, params, *, tile_b_max=None):
    """x: (N, 4) float32  ->  (N, 1) float32 Q-values (matches nn.Linear stack)."""
    w1, b1, w2, b2, w3, b3 = params      # W stored [in, out], b stored (out,)
    n, f_in = x.shape

    if tile_b_max is None:
        tile_b_max = _default_tile_b_max()
    tile_b, n_pad, g = _pick_tiling(n, tile_b_max)

    # Transposed layout: batch on the lane (last) dim; pad ragged batch once.
    # TODO(synk): if the producer can emit feature-major (4, N) activations,
    # pass them directly and drop this pad+transpose HBM pass.
    xT = jnp.pad(x, ((0, n_pad - n), (0, 0))).T               # (4, n_pad)

    w1T = w1.T                                                # (64, 4)
    w2T = w2.T                                                # (64, 64)
    b1c = b1.reshape(-1, 1)                                   # (64, 1)
    b2c = b2.reshape(-1, 1)                                   # (64, 1)
    w3r = w3.T                                                # (1, 64)
    b3s = b3.reshape(1, 1)                                    # (1, 1) -> SMEM

    const = lambda i: (0, 0)

    out = pl.pallas_call(
        dqn_kernel,
        out_shape=jax.ShapeDtypeStruct((1, n_pad), jnp.float32),
        grid_spec=pl.GridSpec(
            grid=(g,),
            in_specs=[
                pl.BlockSpec((f_in, tile_b), lambda i: (0, i)),    # x tile
                pl.BlockSpec(w1T.shape, const),                    # W1^T
                pl.BlockSpec(b1c.shape, const),                    # b1
                pl.BlockSpec(w2T.shape, const),                    # W2^T
                pl.BlockSpec(b2c.shape, const),                    # b2
                pl.BlockSpec(w3r.shape, const),                    # w3 row
                pl.BlockSpec(memory_space=pltpu.MemorySpace.SMEM), # b3 scalar
            ],
            out_specs=pl.BlockSpec((1, tile_b), lambda i: (0, i)),
        ),
        compiler_params=pltpu.CompilerParams(
            dimension_semantics=("parallel",),
            vmem_limit_bytes=32 * 1024 * 1024,
        ),
    )(xT, w1T, b1c, w2T, b2c, w3r, b3s)

    return out[0, :n].reshape(n, 1)


# ----------------------------- init ------------------------------------------

def xavier_uniform(key, fan_in, fan_out):
    # Matches torch.nn.init.xavier_uniform_: U(-a, a), a = sqrt(6/(fan_in+fan_out))
    limit = (6.0 / (fan_in + fan_out)) ** 0.5
    return jax.random.uniform(key, (fan_in, fan_out), jnp.float32, -limit, limit)


def init_params(key):
    k1, k2, k3 = jax.random.split(key, 3)
    w1 = xavier_uniform(k1, 4, 64)
    b1 = jnp.zeros((64,), jnp.float32)
    w2 = xavier_uniform(k2, 64, 64)
    b2 = jnp.zeros((64,), jnp.float32)
    w3 = xavier_uniform(k3, 64, 1)
    b3 = jnp.zeros((1,), jnp.float32)
    return (w1, b1, w2, b2, w3, b3)


def reference_forward(x, params):
    w1, b1, w2, b2, w3, b3 = params
    h1 = jnp.maximum(x @ w1 + b1, 0.0)
    h2 = jnp.maximum(h1 @ w2 + b2, 0.0)
    return h2 @ w3 + b3


# ----------------------------- main -------------------------------------------

if __name__ == "__main__":
    key = jax.random.PRNGKey(0)
    pkey, xkey, xkey2 = jax.random.split(key, 3)

    params = init_params(pkey)
    fwd = jax.jit(functools.partial(deep_q_network_forward, params=params))

    # Small batch (single grid step).
    x = jax.random.normal(xkey, (16, 4), jnp.float32)   # batch=16, state dim=4
    out = jax.block_until_ready(fwd(x))
    ref = reference_forward(x, params)
    assert out.shape == (16, 1)
    assert jnp.allclose(out, ref, atol=1e-4, rtol=1e-4), "mismatch vs reference (n=16)"

    # Ragged batch exercising the multi-step "parallel" grid + low-waste padding.
    x2 = jax.random.normal(xkey2, (300, 4), jnp.float32)
    out2 = jax.block_until_ready(fwd(x2))
    ref2 = reference_forward(x2, params)
    assert out2.shape == (300, 1)
    assert jnp.allclose(out2, ref2, atol=1e-4, rtol=1e-4), "mismatch vs reference (n=300)"

    print("KERNEL_OK")
</pallas_src>

<mosaic_0001>
module attributes {stable_mosaic.version = 11 : i64} {
  func.func @dqn_kernel(%arg0: i32, %arg1: memref<4x128xf32, #tpu.memory_space<vmem>>, %arg2: memref<64x4xf32, #tpu.memory_space<vmem>>, %arg3: memref<64x1xf32, #tpu.memory_space<vmem>>, %arg4: memref<64x64xf32, #tpu.memory_space<vmem>>, %arg5: memref<64x1xf32, #tpu.memory_space<vmem>>, %arg6: memref<1x64xf32, #tpu.memory_space<vmem>>, %arg7: memref<1x1xf32, #tpu.memory_space<smem>>, %arg8: memref<1x128xf32, #tpu.memory_space<vmem>>) attributes {dimension_semantics = [#tpu.dimension_semantics<parallel>], iteration_bounds = array<i64: 1>, scalar_prefetch = 0 : i64, scratch_operands = 0 : i64, tpu.core_type = #tpu.core_type<tc>, window_params = [{transform_indices = @transform_0, window_bounds = array<i64: 4, 128>}, {pipeline_mode = #tpu.pipeline_mode<synchronous>, transform_indices = @transform_1, window_bounds = array<i64: 64, 4>}, {pipeline_mode = #tpu.pipeline_mode<synchronous>, transform_indices = @transform_2, window_bounds = array<i64: 64, 1>}, {pipeline_mode = #tpu.pipeline_mode<synchronous>, transform_indices = @transform_3, window_bounds = array<i64: 64, 64>}, {pipeline_mode = #tpu.pipeline_mode<synchronous>, transform_indices = @transform_4, window_bounds = array<i64: 64, 1>}, {pipeline_mode = #tpu.pipeline_mode<synchronous>, transform_indices = @transform_5, window_bounds = array<i64: 1, 64>}, {transform_indices = @transform_6, window_bounds = array<i64: 1, 1>}, {transform_indices = @transform_7, window_bounds = array<i64: 1, 128>}]} {
    %c0 = arith.constant 0 : index
    %c0_0 = arith.constant 0 : index
    %0 = vector.load %arg2[%c0, %c0_0] : memref<64x4xf32, #tpu.memory_space<vmem>>, vector<64x4xf32>
    %c0_1 = arith.constant 0 : index
    %c0_2 = arith.constant 0 : index
    %1 = vector.load %arg1[%c0_1, %c0_2] : memref<4x128xf32, #tpu.memory_space<vmem>>, vector<4x128xf32>
    %cst = arith.constant dense<0.000000e+00> : vector<64x128xf32>
    %2 = tpu.matmul %0, %1, %cst {dimension_numbers = #tpu.dot_dimension_numbers<[1], [0], [0], [1], [0, 0, 1, 1], [], []>} : vector<64x4xf32>, vector<4x128xf32>, vector<64x128xf32> -> vector<64x128xf32>
    %c0_3 = arith.constant 0 : index
    %c0_4 = arith.constant 0 : index
    %3 = vector.load %arg3[%c0_3, %c0_4] : memref<64x1xf32, #tpu.memory_space<vmem>>, vector<64x1xf32>
    %4 = vector.broadcast %3 : vector<64x1xf32> to vector<64x128xf32>
    %5 = arith.addf %2, %4 : vector<64x128xf32>
    %cst_5 = arith.constant 0.000000e+00 : f32
    %6 = vector.broadcast %cst_5 : f32 to vector<64x128xf32>
    %7 = arith.maximumf %5, %6 : vector<64x128xf32>
    %c0_6 = arith.constant 0 : index
    %c0_7 = arith.constant 0 : index
    %8 = vector.load %arg4[%c0_6, %c0_7] : memref<64x64xf32, #tpu.memory_space<vmem>>, vector<64x64xf32>
    %cst_8 = arith.constant dense<0.000000e+00> : vector<64x128xf32>
    %9 = tpu.matmul %8, %7, %cst_8 {dimension_numbers = #tpu.dot_dimension_numbers<[1], [0], [0], [1], [0, 0, 1, 1], [], []>} : vector<64x64xf32>, vector<64x128xf32>, vector<64x128xf32> -> vector<64x128xf32>
    %c0_9 = arith.constant 0 : index
    %c0_10 = arith.constant 0 : index
    %10 = vector.load %arg5[%c0_9, %c0_10] : memref<64x1xf32, #tpu.memory_space<vmem>>, vector<64x1xf32>
    %11 = vector.broadcast %10 : vector<64x1xf32> to vector<64x128xf32>
    %12 = arith.addf %9, %11 : vector<64x128xf32>
    %cst_11 = arith.constant 0.000000e+00 : f32
    %13 = vector.broadcast %cst_11 : f32 to vector<64x128xf32>
    %14 = arith.maximumf %12, %13 : vector<64x128xf32>
    %c0_12 = arith.constant 0 : index
    %c0_13 = arith.constant 0 : index
    %15 = vector.load %arg6[%c0_12, %c0_13] : memref<1x64xf32, #tpu.memory_space<vmem>>, vector<1x64xf32>
    %cst_14 = arith.constant dense<0.000000e+00> : vector<1x128xf32>
    %16 = tpu.matmul %15, %14, %cst_14 {dimension_numbers = #tpu.dot_dimension_numbers<[1], [0], [0], [1], [0, 0, 1, 1], [], []>} : vector<1x64xf32>, vector<64x128xf32>, vector<1x128xf32> -> vector<1x128xf32>
    %c0_15 = arith.constant 0 : index
    %c0_16 = arith.constant 0 : index
    %17 = memref.load %arg7[%c0_15, %c0_16] : memref<1x1xf32, #tpu.memory_space<smem>>
    %18 = vector.broadcast %17 : f32 to vector<1x128xf32>
    %19 = arith.addf %16, %18 : vector<1x128xf32>
    %c0_17 = arith.constant 0 : index
    %c0_18 = arith.constant 0 : index
    %20 = vector.load %arg8[%c0_17, %c0_18] : memref<1x128xf32, #tpu.memory_space<vmem>>, vector<1x128xf32>
    tpu.vector_store %arg8[%c0_17, %c0_18], %19 {strides = array<i32>} : memref<1x128xf32, #tpu.memory_space<vmem>>, vector<1x128xf32>,
    return
  }
  func.func @transform_0(%arg0: i32) -> (i32, i32) {
    %c0_i32 = arith.constant 0 : i32
    %c0_i32_0 = arith.constant 0 : i32
    return %c0_i32, %arg0 : i32, i32
  }
  func.func @transform_1(%arg0: i32) -> (i32, i32) {
    %c0_i32 = arith.constant 0 : i32
    %c0_i32_0 = arith.constant 0 : i32
    %c0_i32_1 = arith.constant 0 : i32
    return %c0_i32, %c0_i32_0 : i32, i32
  }
  func.func @transform_2(%arg0: i32) -> (i32, i32) {
    %c0_i32 = arith.constant 0 : i32
    %c0_i32_0 = arith.constant 0 : i32
    %c0_i32_1 = arith.constant 0 : i32
    return %c0_i32, %c0_i32_0 : i32, i32
  }
  func.func @transform_3(%arg0: i32) -> (i32, i32) {
    %c0_i32 = arith.constant 0 : i32
    %c0_i32_0 = arith.constant 0 : i32
    %c0_i32_1 = arith.constant 0 : i32
    return %c0_i32, %c0_i32_0 : i32, i32
  }
  func.func @transform_4(%arg0: i32) -> (i32, i32) {
    %c0_i32 = arith.constant 0 : i32
    %c0_i32_0 = arith.constant 0 : i32
    %c0_i32_1 = arith.constant 0 : i32
    return %c0_i32, %c0_i32_0 : i32, i32
  }
  func.func @transform_5(%arg0: i32) -> (i32, i32) {
    %c0_i32 = arith.constant 0 : i32
    %c0_i32_0 = arith.constant 0 : i32
    %c0_i32_1 = arith.constant 0 : i32
    return %c0_i32, %c0_i32_0 : i32, i32
  }
  func.func @transform_6(%arg0: i32) -> (i32, i32) {
    %c0_i32 = arith.constant 0 : i32
    %c0_i32_0 = arith.constant 0 : i32
    %c0_i32_1 = arith.constant 0 : i32
    return %c0_i32, %c0_i32_0 : i32, i32
  }
  func.func @transform_7(%arg0: i32) -> (i32, i32) {
    %c0_i32 = arith.constant 0 : i32
    %c0_i32_0 = arith.constant 0 : i32
    return %c0_i32, %arg0 : i32, i32
  }
}

</mosaic_0001>

<llo_original>
// kernel: deep_q_network_forward.1
$region0: #{deep_q_network_forward.1}
  #allocation0 [shape = 'u32[]', space=smem, size = 0x4, offset = 0x4, fixed_abs, tag = 'smem constant byte address 0x4 - core index']
  #allocation1 [shape = 'u32[144,128]{1,0:T(1,128)}', space=vmem, size = 0x12000, scoped, tag = 'internal scratch']
  #allocation2 [shape = 'f32[1,1]{1,0:T(1,128)S(6)}', space=smem, size = 0x200, scoped, tag = 'scoped memory for deep_q_network_forward.1']
  %s0 = inlined_call_operand.vmem [shape: f32[4,128], index: 0, kind: input, shape index: {}]
  %s1 = inlined_call_operand.vmem [shape: f32[64,4], index: 1, kind: input, shape index: {}]
  %s2 = inlined_call_operand.vmem [shape: f32[64,1], index: 2, kind: input, shape index: {}, may-alias: {2,4}]
  %s3 = inlined_call_operand.hbm [shape: f32[64,64], index: 3, kind: input, shape index: {}]
  %s4 = inlined_call_operand.vmem [shape: f32[64,1], index: 4, kind: input, shape index: {}, may-alias: {2,4}]
  %s5 = inlined_call_operand.vmem [shape: f32[1,64], index: 5, kind: input, shape index: {}]
  %s6 = inlined_call_operand.<no memory space> [shape: f32[1,1], index: 6, kind: input, shape index: {}]
  %s7 = inlined_call_operand.vmem [shape: f32[1,128], index: 7, kind: output, shape index: {}]
  %s8 = sld [smem:[#allocation0]]
  $region42: #{deep_q_network_forward.1} parent=0
    _
  %s10 = ssub.s32 1, %s8
  %s11 = scalar_select 0, %s10, %s8
  %12 = sst [smem:[#allocation2]] %s6
  $region1: #{deep_q_network_forward.1} parent=0
    #allocation3 [shape = 'u8[32768]{0}', space=vmem, size = 0x8000, scoped, tag = 'input window, operand 3, single buffered']
    #allocation4 [shape = 's32[1]{0}', space=sflag, size = 0x4, scoped, tag = 'scoped memory for deep_q_network_forward.1']
    %13 = vsyncpa [#allocation4], 0
    // Predicated region
    $region2: #{deep_q_network_forward.1} parent=1 // pred_check
      _
    $region3: #{deep_q_network_forward.1} parent=1 // pred_check_branch
      %15 = sbr.rel (0) target = $region5
    $region4: #{deep_q_network_forward.1} parent=1 // pred_region
      _
    $region5: #{deep_q_network_forward.1} parent=1 // pred_fallthru
      _
    // Predicated region
    $region6: #{deep_q_network_forward.1} parent=1 // pred_check
      _
    $region7: #{deep_q_network_forward.1} parent=1 // pred_check_branch
      %17 = sbr.rel (0) target = $region9
    $region8: #{deep_q_network_forward.1} parent=1 // pred_region
      _
    $region9: #{deep_q_network_forward.1} parent=1 // pred_fallthru
      _
    // Predicated region
    $region10: #{deep_q_network_forward.1} parent=1 // pred_check
      _
    $region11: #{deep_q_network_forward.1} parent=1 // pred_check_branch
      %19 = sbr.rel (0) target = $region13
    $region12: #{deep_q_network_forward.1} parent=1 // pred_region
      _
    $region13: #{deep_q_network_forward.1} parent=1 // pred_fallthru
      _
    // Predicated region
    $region14: #{deep_q_network_forward.1} parent=1 // pred_check
      _
    $region15: #{deep_q_network_forward.1} parent=1 // pred_check_branch
      %21 = sbr.rel (0) target = $region17
    $region16: #{deep_q_network_forward.1} parent=1 // pred_region
      %s23 = ssub.s32 1024, 1024
      %24 = vsyncadd [#allocation4], %s23
      %s25 = sshll.u32 [#allocation3], 4
      %s26 = int_to_ptr.vmem [resolvable:$true] %s25
      %31 = dma.hbm_to_vmem [thread:$0]  %s3, 1024, %s26, [#allocation4], 128, 128, 8
    $region17: #{deep_q_network_forward.1} parent=1 // pred_fallthru
      _
    // Predicated region
    $region18: #{deep_q_network_forward.1} parent=1 // pred_check
      _
    $region19: #{deep_q_network_forward.1} parent=1 // pred_check_branch
      %33 = sbr.rel (0) target = $region21
    $region20: #{deep_q_network_forward.1} parent=1 // pred_region
      _
    $region21: #{deep_q_network_forward.1} parent=1 // pred_fallthru
      _
    // Predicated region
    $region22: #{deep_q_network_forward.1} parent=1 // pred_check
      _
    $region23: #{deep_q_network_forward.1} parent=1 // pred_check_branch
      %35 = sbr.rel (0) target = $region25
    $region24: #{deep_q_network_forward.1} parent=1 // pred_region
      _
    $region25: #{deep_q_network_forward.1} parent=1 // pred_fallthru
      _
    // Predicated region
    $region26: #{deep_q_network_forward.1} parent=1 // pred_check
      _
    $region27: #{deep_q_network_forward.1} parent=1 // pred_check_branch
      %37 = sbr.rel (0) target = $region29
    $region28: #{deep_q_network_forward.1} parent=1 // pred_region
      _
    $region29: #{deep_q_network_forward.1} parent=1 // pred_fallthru
      _
    // Predicated region
    $region30: #{deep_q_network_forward.1} parent=1 // pred_check
      _
    $region31: #{deep_q_network_forward.1} parent=1 // pred_check_branch
      %39 = sbr.rel (0) target = $region33
    $region32: #{deep_q_network_forward.1} parent=1 // pred_region
      %40 = dma.done [#allocation4], 1024
    $region33: #{deep_q_network_forward.1} parent=1 // pred_fallthru
      _
    %v41 = vld [vmem:[%s1] sm:$0xff]
    %v42 = vld [vmem:[%s1 + $0x8] sm:$0xff]
    %v43 = vld [vmem:[%s1 + $0x10] sm:$0xff]
    %v44 = vld [vmem:[%s1 + $0x18] sm:$0xff]
    %v45 = vld [vmem:[%s1 + $0x20] sm:$0xff]
    %v46 = vld [vmem:[%s1 + $0x28] sm:$0xff]
    %v47 = vld [vmem:[%s1 + $0x30] sm:$0xff]
    %v48 = vld [vmem:[%s1 + $0x38] sm:$0xff]
    %v49 = vld [vmem:[%s0] sm:$0xf]
    %v50 = vld [vmem:[%s2] sm:$0xff]
    %v51 = vld [vmem:[%s2 + $0x8] sm:$0xff]
    %v52 = vld [vmem:[%s2 + $0x10] sm:$0xff]
    %v53 = vld [vmem:[%s2 + $0x18] sm:$0xff]
    %v54 = vld [vmem:[%s2 + $0x20] sm:$0xff]
    %v55 = vld [vmem:[%s2 + $0x28] sm:$0xff]
    %v56 = vld [vmem:[%s2 + $0x30] sm:$0xff]
    %v57 = vld [vmem:[%s2 + $0x38] sm:$0xff]
    %59 = vset.pattern.permute.xlu0 0
    %60 = vperm.xlu0 %59, %v50
    %v61 = vpop.permute.xlu0 %60
    %64 = vset.pattern.permute.xlu0 0
    %65 = vperm.xlu0 %64, %v51
    %v66 = vpop.permute.xlu0 %65
    %69 = vset.pattern.permute.xlu0 0
    %70 = vperm.xlu0 %69, %v52
    %v71 = vpop.permute.xlu0 %70
    %74 = vset.pattern.permute.xlu0 0
    %75 = vperm.xlu0 %74, %v53
    %v76 = vpop.permute.xlu0 %75
    %79 = vset.pattern.permute.xlu0 0
    %80 = vperm.xlu0 %79, %v54
    %v81 = vpop.permute.xlu0 %80
    %84 = vset.pattern.permute.xlu0 0
    %85 = vperm.xlu0 %84, %v55
    %v86 = vpop.permute.xlu0 %85
    %89 = vset.pattern.permute.xlu0 0
    %90 = vperm.xlu0 %89, %v56
    %v91 = vpop.permute.xlu0 %90
    %94 = vset.pattern.permute.xlu0 0
    %95 = vperm.xlu0 %94, %v57
    %v96 = vpop.permute.xlu0 %95
    %vm98 = vcmask 31744
    %v100 = vsel %vm98, %v41, 0
    %v103 = vsel %vm98, %v42, 0
    %v106 = vsel %vm98, %v43, 0
    %v109 = vsel %vm98, %v44, 0
    %v112 = vsel %vm98, %v45, 0
    %v115 = vsel %vm98, %v46, 0
    %v118 = vsel %vm98, %v47, 0
    %v121 = vsel %vm98, %v48, 0
    %vm123 = vcmask 1043456
    %v125 = vsel %vm123, %v49, 0
    %127 = vmatprep.subr.mxu0 0.0
    %128 = vmatpush1.msra.mxu0 %v125
    %129 = vmatprep.subr.mxu0 0.0
    %130 = vmatpush1.msra.mxu0 0.0
    %131 = vmatprep.subr.mxu0 0.0
    %132 = vmatpush1.msra.mxu0 0.0
    %133 = vmatprep.subr.mxu0 0.0
    %134 = vmatpush1.msra.mxu0 0.0
    %135 = vmatprep.subr.mxu0 0.0
    %136 = vmatpush1.msra.mxu0 0.0
    %137 = vmatprep.subr.mxu0 0.0
    %138 = vmatpush1.msra.mxu0 0.0
    %139 = vmatprep.subr.mxu0 0.0
    %140 = vmatpush1.msra.mxu0 0.0
    %141 = vmatprep.subr.mxu0 0.0
    %142 = vmatpush1.msra.mxu0 0.0
    %143 = vmatprep.subr.mxu0 0.0
    %144 = vmatpush1.msra.mxu0 0.0
    %145 = vmatprep.subr.mxu0 0.0
    %146 = vmatpush1.msra.mxu0 0.0
    %147 = vmatprep.subr.mxu0 0.0
    %148 = vmatpush1.msra.mxu0 0.0
    %149 = vmatprep.subr.mxu0 0.0
    %150 = vmatpush1.msra.mxu0 0.0
    %151 = vmatprep.subr.mxu0 0.0
    %152 = vmatpush1.msra.mxu0 0.0
    %153 = vmatprep.subr.mxu0 0.0
    %154 = vmatpush1.msra.mxu0 0.0
    %155 = vmatprep.subr.mxu0 0.0
    %156 = vmatpush1.msra.mxu0 0.0
    %157 = vmatprep.subr.mxu0 0.0
    %158 = vmatpush1.msra.mxu0 0.0
    %159 = vmatprep.subr.mxu0 0.0
    %160 = vmatpush1.msra.mxu0 0.0
    %161 = vmatprep.subr.mxu0 0.0
    %162 = vmatpush1.msra.mxu0 0.0
    %163 = vmatprep.subr.mxu0 0.0
    %164 = vmatpush1.msra.mxu0 0.0
    %165 = vmatprep.subr.mxu0 0.0
    %166 = vmatpush1.msra.mxu0 0.0
    %167 = vmatprep.subr.mxu0 0.0
    %168 = vmatpush1.msra.mxu0 0.0
    %169 = vmatprep.subr.mxu0 0.0
    %170 = vmatpush1.msra.mxu0 0.0
    %171 = vmatprep.subr.mxu0 0.0
    %172 = vmatpush1.msra.mxu0 0.0
    %173 = vmatprep.subr.mxu0 0.0
    %174 = vmatpush1.msra.mxu0 0.0
    %175 = vmatprep.subr.mxu0 0.0
    %176 = vmatpush1.msra.mxu0 0.0
    %177 = vmatprep.subr.mxu0 0.0
    %178 = vmatpush1.msra.mxu0 0.0
    %179 = vmatprep.subr.mxu0 0.0
    %180 = vmatpush1.msra.mxu0 0.0
    %181 = vmatprep.subr.mxu0 0.0
    %182 = vmatpush1.msra.mxu0 0.0
    %183 = vmatprep.subr.mxu0 0.0
    %184 = vmatpush1.msra.mxu0 0.0
    %185 = vmatprep.subr.mxu0 0.0
    %186 = vmatpush1.msra.mxu0 0.0
    %187 = vmatprep.subr.mxu0 0.0
    %188 = vmatpush1.msra.mxu0 0.0
    %189 = vmatprep.subr.mxu0 0.0
    %190 = vmatpush1.msra.mxu0 0.0
    %191 = vmatprep.mubr.f32.mxu0 0.0
    %192 = vmatmul.mubr.f32.gmra.mrb[0].mxu0 %v100
    %v193 = vpop.f32.mrb[0].mxu0
    %v194 = vadd.f32 %v61, %v193
    %v195 = vpop.f32.mrb[0].mxu0
    %196 = vmatprep.mubr.f32.mxu0 0.0
    %197 = vmatmul.mubr.f32.gmra.mrb[0].mxu0 %v103
    %v198 = vpop.f32.mrb[0].mxu0
    %v199 = vadd.f32 %v66, %v198
    %v200 = vpop.f32.mrb[0].mxu0
    %201 = vmatprep.mubr.f32.mxu0 0.0
    %202 = vmatmul.mubr.f32.gmra.mrb[0].mxu0 %v106
    %v203 = vpop.f32.mrb[0].mxu0
    %v204 = vadd.f32 %v71, %v203
    %v205 = vpop.f32.mrb[0].mxu0
    %206 = vmatprep.mubr.f32.mxu0 0.0
    %207 = vmatmul.mubr.f32.gmra.mrb[0].mxu0 %v109
    %v208 = vpop.f32.mrb[0].mxu0
    %v209 = vadd.f32 %v76, %v208
    %v210 = vpop.f32.mrb[0].mxu0
    %211 = vmatprep.mubr.f32.mxu0 0.0
    %212 = vmatmul.mubr.f32.gmra.mrb[0].mxu0 %v112
    %v213 = vpop.f32.mrb[0].mxu0
    %v214 = vadd.f32 %v81, %v213
    %v215 = vpop.f32.mrb[0].mxu0
    %216 = vmatprep.mubr.f32.mxu0 0.0
    %217 = vmatmul.mubr.f32.gmra.mrb[0].mxu0 %v115
    %v218 = vpop.f32.mrb[0].mxu0
    %v219 = vadd.f32 %v86, %v218
    %v220 = vpop.f32.mrb[0].mxu0
    %221 = vmatprep.mubr.f32.mxu0 0.0
    %222 = vmatmul.mubr.f32.gmra.mrb[0].mxu0 %v118
    %v223 = vpop.f32.mrb[0].mxu0
    %v224 = vadd.f32 %v91, %v223
    %v225 = vpop.f32.mrb[0].mxu0
    %226 = vmatprep.mubr.f32.mxu0 0.0
    %227 = vmatmul.mubr.f32.gmra.mrb[0].mxu0 %v121
    %v228 = vpop.f32.mrb[0].mxu0
    %v229 = vadd.f32 %v96, %v228
    %v230 = vpop.f32.mrb[0].mxu0
    %231 = vdwg.mxu0
    %v232 = vmax.f32 %v194, 0.0
    %v233 = vmax.f32 %v199, 0.0
    %v234 = vmax.f32 %v204, 0.0
    %v235 = vmax.f32 %v209, 0.0
    %v236 = vmax.f32 %v214, 0.0
    %v237 = vmax.f32 %v219, 0.0
    %v238 = vmax.f32 %v224, 0.0
    %v239 = vmax.f32 %v229, 0.0
    %v240 = vld [vmem:[#allocation3] sm:$0xff]
    %v241 = vld [vmem:[#allocation3 + $0x8] sm:$0xff]
    %v242 = vld [vmem:[#allocation3 + $0x10] sm:$0xff]
    %v243 = vld [vmem:[#allocation3 + $0x18] sm:$0xff]
    %v244 = vld [vmem:[#allocation3 + $0x20] sm:$0xff]
    %v245 = vld [vmem:[#allocation3 + $0x28] sm:$0xff]
    %v246 = vld [vmem:[#allocation3 + $0x30] sm:$0xff]
    %v247 = vld [vmem:[#allocation3 + $0x38] sm:$0xff]
    %v248 = vld [vmem:[%s4] sm:$0xff]
    %v249 = vld [vmem:[%s4 + $0x8] sm:$0xff]
    %v250 = vld [vmem:[%s4 + $0x10] sm:$0xff]
    %v251 = vld [vmem:[%s4 + $0x18] sm:$0xff]
    %v252 = vld [vmem:[%s4 + $0x20] sm:$0xff]
    %v253 = vld [vmem:[%s4 + $0x28] sm:$0xff]
    %v254 = vld [vmem:[%s4 + $0x30] sm:$0xff]
    %v255 = vld [vmem:[%s4 + $0x38] sm:$0xff]
    %257 = vset.pattern.permute.xlu0 0
    %258 = vperm.xlu0 %257, %v248
    %v259 = vpop.permute.xlu0 %258
    %262 = vset.pattern.permute.xlu0 0
    %263 = vperm.xlu0 %262, %v249
    %v264 = vpop.permute.xlu0 %263
    %267 = vset.pattern.permute.xlu0 0
    %268 = vperm.xlu0 %267, %v250
    %v269 = vpop.permute.xlu0 %268
    %272 = vset.pattern.permute.xlu0 0
    %273 = vperm.xlu0 %272, %v251
    %v274 = vpop.permute.xlu0 %273
    %277 = vset.pattern.permute.xlu0 0
    %278 = vperm.xlu0 %277, %v252
    %v279 = vpop.permute.xlu0 %278
    %282 = vset.pattern.permute.xlu0 0
    %283 = vperm.xlu0 %282, %v253
    %v284 = vpop.permute.xlu0 %283
    %287 = vset.pattern.permute.xlu0 0
    %288 = vperm.xlu0 %287, %v254
    %v289 = vpop.permute.xlu0 %288
    %292 = vset.pattern.permute.xlu0 0
    %293 = vperm.xlu0 %292, %v255
    %v294 = vpop.permute.xlu0 %293
    %vm296 = vcmask 523264
    %v298 = vsel %vm296, %v240, 0
    %v301 = vsel %vm296, %v241, 0
    %v304 = vsel %vm296, %v242, 0
    %v307 = vsel %vm296, %v243, 0
    %v310 = vsel %vm296, %v244, 0
    %v313 = vsel %vm296, %v245, 0
    %v316 = vsel %vm296, %v246, 0
    %v319 = vsel %vm296, %v247, 0
    %321 = vmatprep.subr.mxu0 0.0
    %322 = vmatpush1.msra.mxu0 %v232
    %323 = vmatprep.subr.mxu0 0.0
    %324 = vmatpush1.msra.mxu0 %v233
    %325 = vmatprep.subr.mxu0 0.0
    %326 = vmatpush1.msra.mxu0 %v234
    %327 = vmatprep.subr.mxu0 0.0
    %328 = vmatpush1.msra.mxu0 %v235
    %329 = vmatprep.subr.mxu0 0.0
    %330 = vmatpush1.msra.mxu0 %v236
    %331 = vmatprep.subr.mxu0 0.0
    %332 = vmatpush1.msra.mxu0 %v237
    %333 = vmatprep.subr.mxu0 0.0
    %334 = vmatpush1.msra.mxu0 %v238
    %335 = vmatprep.subr.mxu0 0.0
    %336 = vmatpush1.msra.mxu0 %v239
    %337 = vmatprep.subr.mxu0 0.0
    %338 = vmatpush1.msra.mxu0 0.0
    %339 = vmatprep.subr.mxu0 0.0
    %340 = vmatpush1.msra.mxu0 0.0
    %341 = vmatprep.subr.mxu0 0.0
    %342 = vmatpush1.msra.mxu0 0.0
    %343 = vmatprep.subr.mxu0 0.0
    %344 = vmatpush1.msra.mxu0 0.0
    %345 = vmatprep.subr.mxu0 0.0
    %346 = vmatpush1.msra.mxu0 0.0
    %347 = vmatprep.subr.mxu0 0.0
    %348 = vmatpush1.msra.mxu0 0.0
    %349 = vmatprep.subr.mxu0 0.0
    %350 = vmatpush1.msra.mxu0 0.0
    %351 = vmatprep.subr.mxu0 0.0
    %352 = vmatpush1.msra.mxu0 0.0
    %353 = vmatprep.subr.mxu0 0.0
    %354 = vmatpush1.msra.mxu0 0.0
    %355 = vmatprep.subr.mxu0 0.0
    %356 = vmatpush1.msra.mxu0 0.0
    %357 = vmatprep.subr.mxu0 0.0
    %358 = vmatpush1.msra.mxu0 0.0
    %359 = vmatprep.subr.mxu0 0.0
    %360 = vmatpush1.msra.mxu0 0.0
    %361 = vmatprep.subr.mxu0 0.0
    %362 = vmatpush1.msra.mxu0 0.0
    %363 = vmatprep.subr.mxu0 0.0
    %364 = vmatpush1.msra.mxu0 0.0
    %365 = vmatprep.subr.mxu0 0.0
    %366 = vmatpush1.msra.mxu0 0.0
    %367 = vmatprep.subr.mxu0 0.0
    %368 = vmatpush1.msra.mxu0 0.0
    %369 = vmatprep.subr.mxu0 0.0
    %370 = vmatpush1.msra.mxu0 0.0
    %371 = vmatprep.subr.mxu0 0.0
    %372 = vmatpush1.msra.mxu0 0.0
    %373 = vmatprep.subr.mxu0 0.0
    %374 = vmatpush1.msra.mxu0 0.0
    %375 = vmatprep.subr.mxu0 0.0
    %376 = vmatpush1.msra.mxu0 0.0
    %377 = vmatprep.subr.mxu0 0.0
    %378 = vmatpush1.msra.mxu0 0.0
    %379 = vmatprep.subr.mxu0 0.0
    %380 = vmatpush1.msra.mxu0 0.0
    %381 = vmatprep.subr.mxu0 0.0
    %382 = vmatpush1.msra.mxu0 0.0
    %383 = vmatprep.subr.mxu0 0.0
    %384 = vmatpush1.msra.mxu0 0.0
    %385 = vmatprep.mubr.f32.mxu0 0.0
    %386 = vmatmul.mubr.f32.gmra.mrb[0].mxu0 %v298
    %v387 = vpop.f32.mrb[0].mxu0
    %v388 = vadd.f32 %v259, %v387
    %v389 = vpop.f32.mrb[0].mxu0
    %390 = vmatprep.mubr.f32.mxu0 0.0
    %391 = vmatmul.mubr.f32.gmra.mrb[0].mxu0 %v301
    %v392 = vpop.f32.mrb[0].mxu0
    %v393 = vadd.f32 %v264, %v392
    %v394 = vpop.f32.mrb[0].mxu0
    %395 = vmatprep.mubr.f32.mxu0 0.0
    %396 = vmatmul.mubr.f32.gmra.mrb[0].mxu0 %v304
    %v397 = vpop.f32.mrb[0].mxu0
    %v398 = vadd.f32 %v269, %v397
    %v399 = vpop.f32.mrb[0].mxu0
    %400 = vmatprep.mubr.f32.mxu0 0.0
    %401 = vmatmul.mubr.f32.gmra.mrb[0].mxu0 %v307
    %v402 = vpop.f32.mrb[0].mxu0
    %v403 = vadd.f32 %v274, %v402
    %v404 = vpop.f32.mrb[0].mxu0
    %405 = vmatprep.mubr.f32.mxu0 0.0
    %406 = vmatmul.mubr.f32.gmra.mrb[0].mxu0 %v310
    %v407 = vpop.f32.mrb[0].mxu0
    %v408 = vadd.f32 %v279, %v407
    %v409 = vpop.f32.mrb[0].mxu0
    %410 = vmatprep.mubr.f32.mxu0 0.0
    %411 = vmatmul.mubr.f32.gmra.mrb[0].mxu0 %v313
    %v412 = vpop.f32.mrb[0].mxu0
    %v413 = vadd.f32 %v284, %v412
    %v414 = vpop.f32.mrb[0].mxu0
    %415 = vmatprep.mubr.f32.mxu0 0.0
    %416 = vmatmul.mubr.f32.gmra.mrb[0].mxu0 %v316
    %v417 = vpop.f32.mrb[0].mxu0
    %v418 = vadd.f32 %v289, %v417
    %v419 = vpop.f32.mrb[0].mxu0
    %420 = vmatprep.mubr.f32.mxu0 0.0
    %421 = vmatmul.mubr.f32.gmra.mrb[0].mxu0 %v319
    %v422 = vpop.f32.mrb[0].mxu0
    %v423 = vadd.f32 %v294, %v422
    %v424 = vpop.f32.mrb[0].mxu0
    %425 = vdwg.mxu0
    %v426 = vmax.f32 %v388, 0.0
    %v427 = vmax.f32 %v393, 0.0
    %v428 = vmax.f32 %v398, 0.0
    %v429 = vmax.f32 %v403, 0.0
    %v430 = vmax.f32 %v408, 0.0
    %v431 = vmax.f32 %v413, 0.0
    %v432 = vmax.f32 %v418, 0.0
    %v433 = vmax.f32 %v423, 0.0
    %v434 = vld [vmem:[%s5] sm:$0x1]
    %s435 = sld [smem:[#allocation2]]
    %v436 = vstv %s435
    %v438 = vsel %vm296, %v434, 0
    %440 = vmatprep.subr.mxu0 0.0
    %441 = vmatpush1.msra.mxu0 %v426
    %442 = vmatprep.subr.mxu0 0.0
    %443 = vmatpush1.msra.mxu0 %v427
    %444 = vmatprep.subr.mxu0 0.0
    %445 = vmatpush1.msra.mxu0 %v428
    %446 = vmatprep.subr.mxu0 0.0
    %447 = vmatpush1.msra.mxu0 %v429
    %448 = vmatprep.subr.mxu0 0.0
    %449 = vmatpush1.msra.mxu0 %v430
    %450 = vmatprep.subr.mxu0 0.0
    %451 = vmatpush1.msra.mxu0 %v431
    %452 = vmatprep.subr.mxu0 0.0
    %453 = vmatpush1.msra.mxu0 %v432
    %454 = vmatprep.subr.mxu0 0.0
    %455 = vmatpush1.msra.mxu0 %v433
    %456 = vmatprep.subr.mxu0 0.0
    %457 = vmatpush1.msra.mxu0 0.0
    %458 = vmatprep.subr.mxu0 0.0
    %459 = vmatpush1.msra.mxu0 0.0
    %460 = vmatprep.subr.mxu0 0.0
    %461 = vmatpush1.msra.mxu0 0.0
    %462 = vmatprep.subr.mxu0 0.0
    %463 = vmatpush1.msra.mxu0 0.0
    %464 = vmatprep.subr.mxu0 0.0
    %465 = vmatpush1.msra.mxu0 0.0
    %466 = vmatprep.subr.mxu0 0.0
    %467 = vmatpush1.msra.mxu0 0.0
    %468 = vmatprep.subr.mxu0 0.0
    %469 = vmatpush1.msra.mxu0 0.0
    %470 = vmatprep.subr.mxu0 0.0
    %471 = vmatpush1.msra.mxu0 0.0
    %472 = vmatprep.subr.mxu0 0.0
    %473 = vmatpush1.msra.mxu0 0.0
    %474 = vmatprep.subr.mxu0 0.0
    %475 = vmatpush1.msra.mxu0 0.0
    %476 = vmatprep.subr.mxu0 0.0
    %477 = vmatpush1.msra.mxu0 0.0
    %478 = vmatprep.subr.mxu0 0.0
    %479 = vmatpush1.msra.mxu0 0.0
    %480 = vmatprep.subr.mxu0 0.0
    %481 = vmatpush1.msra.mxu0 0.0
    %482 = vmatprep.subr.mxu0 0.0
    %483 = vmatpush1.msra.mxu0 0.0
    %484 = vmatprep.subr.mxu0 0.0
    %485 = vmatpush1.msra.mxu0 0.0
    %486 = vmatprep.subr.mxu0 0.0
    %487 = vmatpush1.msra.mxu0 0.0
    %488 = vmatprep.subr.mxu0 0.0
    %489 = vmatpush1.msra.mxu0 0.0
    %490 = vmatprep.subr.mxu0 0.0
    %491 = vmatpush1.msra.mxu0 0.0
    %492 = vmatprep.subr.mxu0 0.0
    %493 = vmatpush1.msra.mxu0 0.0
    %494 = vmatprep.subr.mxu0 0.0
    %495 = vmatpush1.msra.mxu0 0.0
    %496 = vmatprep.subr.mxu0 0.0
    %497 = vmatpush1.msra.mxu0 0.0
    %498 = vmatprep.subr.mxu0 0.0
    %499 = vmatpush1.msra.mxu0 0.0
    %500 = vmatprep.subr.mxu0 0.0
    %501 = vmatpush1.msra.mxu0 0.0
    %502 = vmatprep.subr.mxu0 0.0
    %503 = vmatpush1.msra.mxu0 0.0
    %504 = vmatprep.mubr.f32.mxu0 0.0
    %505 = vmatmul.mubr.f32.gmra.mrb[0].mxu0 %v438
    %v506 = vpop.f32.mrb[0].mxu0
    %v507 = vadd.f32 %v436, %v506
    %v508 = vpop.f32.mrb[0].mxu0
    %509 = vdwg.mxu0
    %510 = vst [vmem:[%s7] sm:$0x1] %v507
    // Predicated region
    $region34: #{deep_q_network_forward.1} parent=1 // pred_check
      _
    $region35: #{deep_q_network_forward.1} parent=1 // pred_check_branch
      %512 = sbr.rel (0) target = $region37
    $region36: #{deep_q_network_forward.1} parent=1 // pred_region
      _
    $region37: #{deep_q_network_forward.1} parent=1 // pred_fallthru
      _
    // Predicated region
    $region38: #{deep_q_network_forward.1} parent=1 // pred_check
      _
    $region39: #{deep_q_network_forward.1} parent=1 // pred_check_branch
      %514 = sbr.rel (0) target = $region41
    $region40: #{deep_q_network_forward.1} parent=1 // pred_region
      _
    $region41: #{deep_q_network_forward.1} parent=1 // pred_fallthru
      _
    %515 = vsyncpa [#allocation4], 1

</llo_original>
